<compile_context>
chip_gen: v7x
topology: tpu7x:2x2x1
jax: 0.10.0
libtpu: 0.0.40
codegen_flags: <defaults>
</compile_context>

<pallas_src>
import jax
import jax.numpy as jnp
from jax.experimental import pallas as pl
from jax.experimental.pallas import tpu as pltpu

_EPS = 1e-9


def _round_up(n, m):
    return ((n + m - 1) // m) * m


def _trap_fls_kernel(x_ref, alo_ref, slo_ref, ahi_ref, shi_ref, h_ref, y_ref):
    # x_ref   : (D, TB)   batch tile, batch on lanes
    # a/s refs: (R, D)    trapezoid edge offsets / slopes
    # h_ref   : (R, 1)    rule heights (lane-broadcast)
    # y_ref   : (1, TB)   defuzzified output (lane-dense store)
    D = x_ref.shape[0]

    # Hoist parameter loads out of the per-feature loop (tiny: (R, D) each).
    alo = alo_ref[...]
    slo = slo_ref[...]
    ahi = ahi_ref[...]
    shi = shi_ref[...]
    h = h_ref[...]                                            # (R, 1)

    def membership(d):
        xd = x_ref[d:d + 1, :].astype(jnp.float32)            # (1, TB)
        up = jnp.clip((xd - alo[:, d:d + 1]) * slo[:, d:d + 1], 0.0, 1.0)   # (R, TB)
        dn = jnp.clip((ahi[:, d:d + 1] - xd) * shi[:, d:d + 1], 0.0, 1.0)   # (R, TB)
        return jnp.minimum(up, dn)                            # (R, TB)

    # Fused product t-norm over features: running (R, TB) accumulator.
    f = membership(0)
    for d in range(1, D):                                     # D is small & static
        f = f * membership(d)

    # Height defuzzification: sublane reductions over the R rules.
    num = jnp.sum(f * h, axis=0, keepdims=True)               # (1, TB)
    den = jnp.sum(f, axis=0, keepdims=True) + _EPS            # (1, TB)
    y_ref[...] = (num / den).astype(y_ref.dtype)


def trap_fls(x, a_lo, s_lo, a_hi, s_hi, h, *, batch_tile=512):
    """Fused trapezoidal-FLS forward pass.

    x               : (B, D) float32
    a_lo, s_lo      : (R, D) rising-edge offset / slope
    a_hi, s_hi      : (R, D) falling-edge offset / slope
    h               : (1, R) rule heights
    returns y       : (B, 1) float32
    """
    B, D = x.shape
    R = a_lo.shape[0]

    # Lane tile: multiple of 128, capped at batch_tile; pad ragged batches.
    tb = min(_round_up(batch_tile, 128), _round_up(B, 128))
    b_pad = _round_up(B, tb)

    x_t = jnp.pad(x.T.astype(jnp.float32), ((0, 0), (0, b_pad - B)))   # (D, Bp)
    h_col = h.reshape(R, 1).astype(jnp.float32)                        # (R, 1)

    grid = (b_pad // tb,)
    param_spec = pl.BlockSpec((R, D), lambda i: (0, 0))

    y_t = pl.pallas_call(
        _trap_fls_kernel,
        out_shape=jax.ShapeDtypeStruct((1, b_pad), jnp.float32),
        grid_spec=pltpu.PrefetchScalarGridSpec(
            num_scalar_prefetch=0,
            grid=grid,
            in_specs=[
                pl.BlockSpec((D, tb), lambda i: (0, i)),      # x (batch on lanes)
                param_spec,                                   # a_lo
                param_spec,                                   # s_lo
                param_spec,                                   # a_hi
                param_spec,                                   # s_hi
                pl.BlockSpec((R, 1), lambda i: (0, 0)),       # heights
            ],
            out_specs=pl.BlockSpec((1, tb), lambda i: (0, i)),
        ),
        compiler_params=pltpu.CompilerParams(
            dimension_semantics=("parallel",),                # megacore sharding on v7x
        ),
    )(x_t, a_lo.astype(jnp.float32), s_lo.astype(jnp.float32),
      a_hi.astype(jnp.float32), s_hi.astype(jnp.float32), h_col)

    return y_t[:, :B].T                                       # (B, 1)


def reference_trap_fls(x, a_lo, s_lo, a_hi, s_hi, h):
    """Pure-JAX reference for correctness checking."""
    xb = x[:, None, :]                                        # (B, 1, D)
    mu_up = jnp.clip((xb - a_lo[None]) * s_lo[None], 0.0, 1.0)
    mu_dn = jnp.clip((a_hi[None] - xb) * s_hi[None], 0.0, 1.0)
    mu = jnp.minimum(mu_up, mu_dn)                            # (B, R, D)
    f = jnp.prod(mu, axis=-1)                                 # (B, R)
    num = jnp.sum(f * h, axis=-1, keepdims=True)              # (B, 1)
    den = jnp.sum(f, axis=-1, keepdims=True) + _EPS
    return num / den


if __name__ == "__main__":
    # Small shapes consistent with TrapFLSLayer(xDim, rule_num) / BasicOneStepModel(yDim=1)
    B, xDim, rule_num = 16, 8, 16

    key = jax.random.PRNGKey(0)
    kx, ka1, ks1, ka2, ks2, kh = jax.random.split(key, 6)

    x = jax.random.normal(kx, (B, xDim), dtype=jnp.float32)

    # Deterministic synthetic parameters (the module's __init__ defines shapes only).
    a_lo = jax.random.uniform(ka1, (rule_num, xDim), minval=-1.5, maxval=-0.5)
    s_lo = jax.random.uniform(ks1, (rule_num, xDim), minval=0.5, maxval=2.0)
    a_hi = jax.random.uniform(ka2, (rule_num, xDim), minval=0.5, maxval=1.5)
    s_hi = jax.random.uniform(ks2, (rule_num, xDim), minval=0.5, maxval=2.0)
    h = jax.random.normal(kh, (1, rule_num), dtype=jnp.float32)

    y = trap_fls(x, a_lo, s_lo, a_hi, s_hi, h, batch_tile=512)
    y = jax.block_until_ready(y)

    y_ref = reference_trap_fls(x, a_lo, s_lo, a_hi, s_hi, h)
    assert y.shape == (B, 1)
    assert jnp.allclose(y, y_ref, atol=1e-5, rtol=1e-5), "mismatch vs reference"

    print("KERNEL_OK")
</pallas_src>

<mosaic_0001>
module attributes {stable_mosaic.version = 11 : i64} {
  func.func @_trap_fls_kernel(%arg0: i32, %arg1: memref<8x128xf32, #tpu.memory_space<vmem>>, %arg2: memref<16x8xf32, #tpu.memory_space<vmem>>, %arg3: memref<16x8xf32, #tpu.memory_space<vmem>>, %arg4: memref<16x8xf32, #tpu.memory_space<vmem>>, %arg5: memref<16x8xf32, #tpu.memory_space<vmem>>, %arg6: memref<16x1xf32, #tpu.memory_space<vmem>>, %arg7: memref<1x128xf32, #tpu.memory_space<vmem>>) attributes {dimension_semantics = [#tpu.dimension_semantics<parallel>], iteration_bounds = array<i64: 1>, scalar_prefetch = 0 : i64, scratch_operands = 0 : i64, tpu.core_type = #tpu.core_type<tc>, window_params = [{transform_indices = @transform_0, window_bounds = array<i64: 8, 128>}, {pipeline_mode = #tpu.pipeline_mode<synchronous>, transform_indices = @transform_1, window_bounds = array<i64: 16, 8>}, {pipeline_mode = #tpu.pipeline_mode<synchronous>, transform_indices = @transform_2, window_bounds = array<i64: 16, 8>}, {pipeline_mode = #tpu.pipeline_mode<synchronous>, transform_indices = @transform_3, window_bounds = array<i64: 16, 8>}, {pipeline_mode = #tpu.pipeline_mode<synchronous>, transform_indices = @transform_4, window_bounds = array<i64: 16, 8>}, {pipeline_mode = #tpu.pipeline_mode<synchronous>, transform_indices = @transform_5, window_bounds = array<i64: 16, 1>}, {transform_indices = @transform_6, window_bounds = array<i64: 1, 128>}]} {
    %c0 = arith.constant 0 : index
    %c0_0 = arith.constant 0 : index
    %0 = vector.load %arg2[%c0, %c0_0] : memref<16x8xf32, #tpu.memory_space<vmem>>, vector<16x8xf32>
    %c0_1 = arith.constant 0 : index
    %c0_2 = arith.constant 0 : index
    %1 = vector.load %arg3[%c0_1, %c0_2] : memref<16x8xf32, #tpu.memory_space<vmem>>, vector<16x8xf32>
    %c0_3 = arith.constant 0 : index
    %c0_4 = arith.constant 0 : index
    %2 = vector.load %arg4[%c0_3, %c0_4] : memref<16x8xf32, #tpu.memory_space<vmem>>, vector<16x8xf32>
    %c0_5 = arith.constant 0 : index
    %c0_6 = arith.constant 0 : index
    %3 = vector.load %arg5[%c0_5, %c0_6] : memref<16x8xf32, #tpu.memory_space<vmem>>, vector<16x8xf32>
    %c0_7 = arith.constant 0 : index
    %c0_8 = arith.constant 0 : index
    %4 = vector.load %arg6[%c0_7, %c0_8] : memref<16x1xf32, #tpu.memory_space<vmem>>, vector<16x1xf32>
    %c0_9 = arith.constant 0 : index
    %c0_10 = arith.constant 0 : index
    %5 = vector.load %arg1[%c0_9, %c0_10] : memref<8x128xf32, #tpu.memory_space<vmem>>, vector<1x128xf32>
    %6 = vector.extract_strided_slice %0 {offsets = [0, 0], sizes = [16, 1], strides = [1, 1]} : vector<16x8xf32> to vector<16x1xf32>
    %7 = vector.broadcast %5 : vector<1x128xf32> to vector<16x128xf32>
    %8 = vector.broadcast %6 : vector<16x1xf32> to vector<16x128xf32>
    %9 = arith.subf %7, %8 : vector<16x128xf32>
    %10 = vector.extract_strided_slice %1 {offsets = [0, 0], sizes = [16, 1], strides = [1, 1]} : vector<16x8xf32> to vector<16x1xf32>
    %11 = vector.broadcast %10 : vector<16x1xf32> to vector<16x128xf32>
    %12 = arith.mulf %9, %11 : vector<16x128xf32>
    %cst = arith.constant 0.000000e+00 : f32
    %cst_11 = arith.constant 1.000000e+00 : f32
    %13 = vector.broadcast %cst : f32 to vector<16x128xf32>
    %14 = arith.maximumf %13, %12 : vector<16x128xf32>
    %15 = vector.broadcast %cst_11 : f32 to vector<16x128xf32>
    %16 = arith.minimumf %15, %14 : vector<16x128xf32>
    %17 = vector.extract_strided_slice %2 {offsets = [0, 0], sizes = [16, 1], strides = [1, 1]} : vector<16x8xf32> to vector<16x1xf32>
    %18 = vector.broadcast %17 : vector<16x1xf32> to vector<16x128xf32>
    %19 = vector.broadcast %5 : vector<1x128xf32> to vector<16x128xf32>
    %20 = arith.subf %18, %19 : vector<16x128xf32>
    %21 = vector.extract_strided_slice %3 {offsets = [0, 0], sizes = [16, 1], strides = [1, 1]} : vector<16x8xf32> to vector<16x1xf32>
    %22 = vector.broadcast %21 : vector<16x1xf32> to vector<16x128xf32>
    %23 = arith.mulf %20, %22 : vector<16x128xf32>
    %cst_12 = arith.constant 0.000000e+00 : f32
    %cst_13 = arith.constant 1.000000e+00 : f32
    %24 = vector.broadcast %cst_12 : f32 to vector<16x128xf32>
    %25 = arith.maximumf %24, %23 : vector<16x128xf32>
    %26 = vector.broadcast %cst_13 : f32 to vector<16x128xf32>
    %27 = arith.minimumf %26, %25 : vector<16x128xf32>
    %28 = arith.minimumf %16, %27 : vector<16x128xf32>
    %c1 = arith.constant 1 : index
    %c0_14 = arith.constant 0 : index
    %29 = vector.load %arg1[%c1, %c0_14] : memref<8x128xf32, #tpu.memory_space<vmem>>, vector<1x128xf32>
    %30 = vector.extract_strided_slice %0 {offsets = [0, 1], sizes = [16, 1], strides = [1, 1]} : vector<16x8xf32> to vector<16x1xf32>
    %31 = vector.broadcast %29 : vector<1x128xf32> to vector<16x128xf32>
    %32 = vector.broadcast %30 : vector<16x1xf32> to vector<16x128xf32>
    %33 = arith.subf %31, %32 : vector<16x128xf32>
    %34 = vector.extract_strided_slice %1 {offsets = [0, 1], sizes = [16, 1], strides = [1, 1]} : vector<16x8xf32> to vector<16x1xf32>
    %35 = vector.broadcast %34 : vector<16x1xf32> to vector<16x128xf32>
    %36 = arith.mulf %33, %35 : vector<16x128xf32>
    %cst_15 = arith.constant 0.000000e+00 : f32
    %cst_16 = arith.constant 1.000000e+00 : f32
    %37 = vector.broadcast %cst_15 : f32 to vector<16x128xf32>
    %38 = arith.maximumf %37, %36 : vector<16x128xf32>
    %39 = vector.broadcast %cst_16 : f32 to vector<16x128xf32>
    %40 = arith.minimumf %39, %38 : vector<16x128xf32>
    %41 = vector.extract_strided_slice %2 {offsets = [0, 1], sizes = [16, 1], strides = [1, 1]} : vector<16x8xf32> to vector<16x1xf32>
    %42 = vector.broadcast %41 : vector<16x1xf32> to vector<16x128xf32>
    %43 = vector.broadcast %29 : vector<1x128xf32> to vector<16x128xf32>
    %44 = arith.subf %42, %43 : vector<16x128xf32>
    %45 = vector.extract_strided_slice %3 {offsets = [0, 1], sizes = [16, 1], strides = [1, 1]} : vector<16x8xf32> to vector<16x1xf32>
    %46 = vector.broadcast %45 : vector<16x1xf32> to vector<16x128xf32>
    %47 = arith.mulf %44, %46 : vector<16x128xf32>
    %cst_17 = arith.constant 0.000000e+00 : f32
    %cst_18 = arith.constant 1.000000e+00 : f32
    %48 = vector.broadcast %cst_17 : f32 to vector<16x128xf32>
    %49 = arith.maximumf %48, %47 : vector<16x128xf32>
    %50 = vector.broadcast %cst_18 : f32 to vector<16x128xf32>
    %51 = arith.minimumf %50, %49 : vector<16x128xf32>
    %52 = arith.minimumf %40, %51 : vector<16x128xf32>
    %53 = arith.mulf %28, %52 : vector<16x128xf32>
    %c2 = arith.constant 2 : index
    %c0_19 = arith.constant 0 : index
    %54 = vector.load %arg1[%c2, %c0_19] : memref<8x128xf32, #tpu.memory_space<vmem>>, vector<1x128xf32>
    %55 = vector.extract_strided_slice %0 {offsets = [0, 2], sizes = [16, 1], strides = [1, 1]} : vector<16x8xf32> to vector<16x1xf32>
    %56 = vector.broadcast %54 : vector<1x128xf32> to vector<16x128xf32>
    %57 = vector.broadcast %55 : vector<16x1xf32> to vector<16x128xf32>
    %58 = arith.subf %56, %57 : vector<16x128xf32>
    %59 = vector.extract_strided_slice %1 {offsets = [0, 2], sizes = [16, 1], strides = [1, 1]} : vector<16x8xf32> to vector<16x1xf32>
    %60 = vector.broadcast %59 : vector<16x1xf32> to vector<16x128xf32>
    %61 = arith.mulf %58, %60 : vector<16x128xf32>
    %cst_20 = arith.constant 0.000000e+00 : f32
    %cst_21 = arith.constant 1.000000e+00 : f32
    %62 = vector.broadcast %cst_20 : f32 to vector<16x128xf32>
    %63 = arith.maximumf %62, %61 : vector<16x128xf32>
    %64 = vector.broadcast %cst_21 : f32 to vector<16x128xf32>
    %65 = arith.minimumf %64, %63 : vector<16x128xf32>
    %66 = vector.extract_strided_slice %2 {offsets = [0, 2], sizes = [16, 1], strides = [1, 1]} : vector<16x8xf32> to vector<16x1xf32>
    %67 = vector.broadcast %66 : vector<16x1xf32> to vector<16x128xf32>
    %68 = vector.broadcast %54 : vector<1x128xf32> to vector<16x128xf32>
    %69 = arith.subf %67, %68 : vector<16x128xf32>
    %70 = vector.extract_strided_slice %3 {offsets = [0, 2], sizes = [16, 1], strides = [1, 1]} : vector<16x8xf32> to vector<16x1xf32>
    %71 = vector.broadcast %70 : vector<16x1xf32> to vector<16x128xf32>
    %72 = arith.mulf %69, %71 : vector<16x128xf32>
    %cst_22 = arith.constant 0.000000e+00 : f32
    %cst_23 = arith.constant 1.000000e+00 : f32
    %73 = vector.broadcast %cst_22 : f32 to vector<16x128xf32>
    %74 = arith.maximumf %73, %72 : vector<16x128xf32>
    %75 = vector.broadcast %cst_23 : f32 to vector<16x128xf32>
    %76 = arith.minimumf %75, %74 : vector<16x128xf32>
    %77 = arith.minimumf %65, %76 : vector<16x128xf32>
    %78 = arith.mulf %53, %77 : vector<16x128xf32>
    %c3 = arith.constant 3 : index
    %c0_24 = arith.constant 0 : index
    %79 = vector.load %arg1[%c3, %c0_24] : memref<8x128xf32, #tpu.memory_space<vmem>>, vector<1x128xf32>
    %80 = vector.extract_strided_slice %0 {offsets = [0, 3], sizes = [16, 1], strides = [1, 1]} : vector<16x8xf32> to vector<16x1xf32>
    %81 = vector.broadcast %79 : vector<1x128xf32> to vector<16x128xf32>
    %82 = vector.broadcast %80 : vector<16x1xf32> to vector<16x128xf32>
    %83 = arith.subf %81, %82 : vector<16x128xf32>
    %84 = vector.extract_strided_slice %1 {offsets = [0, 3], sizes = [16, 1], strides = [1, 1]} : vector<16x8xf32> to vector<16x1xf32>
    %85 = vector.broadcast %84 : vector<16x1xf32> to vector<16x128xf32>
    %86 = arith.mulf %83, %85 : vector<16x128xf32>
    %cst_25 = arith.constant 0.000000e+00 : f32
    %cst_26 = arith.constant 1.000000e+00 : f32
    %87 = vector.broadcast %cst_25 : f32 to vector<16x128xf32>
    %88 = arith.maximumf %87, %86 : vector<16x128xf32>
    %89 = vector.broadcast %cst_26 : f32 to vector<16x128xf32>
    %90 = arith.minimumf %89, %88 : vector<16x128xf32>
    %91 = vector.extract_strided_slice %2 {offsets = [0, 3], sizes = [16, 1], strides = [1, 1]} : vector<16x8xf32> to vector<16x1xf32>
    %92 = vector.broadcast %91 : vector<16x1xf32> to vector<16x128xf32>
    %93 = vector.broadcast %79 : vector<1x128xf32> to vector<16x128xf32>
    %94 = arith.subf %92, %93 : vector<16x128xf32>
    %95 = vector.extract_strided_slice %3 {offsets = [0, 3], sizes = [16, 1], strides = [1, 1]} : vector<16x8xf32> to vector<16x1xf32>
    %96 = vector.broadcast %95 : vector<16x1xf32> to vector<16x128xf32>
    %97 = arith.mulf %94, %96 : vector<16x128xf32>
    %cst_27 = arith.constant 0.000000e+00 : f32
    %cst_28 = arith.constant 1.000000e+00 : f32
    %98 = vector.broadcast %cst_27 : f32 to vector<16x128xf32>
    %99 = arith.maximumf %98, %97 : vector<16x128xf32>
    %100 = vector.broadcast %cst_28 : f32 to vector<16x128xf32>
    %101 = arith.minimumf %100, %99 : vector<16x128xf32>
    %102 = arith.minimumf %90, %101 : vector<16x128xf32>
    %103 = arith.mulf %78, %102 : vector<16x128xf32>
    %c4 = arith.constant 4 : index
    %c0_29 = arith.constant 0 : index
    %104 = vector.load %arg1[%c4, %c0_29] : memref<8x128xf32, #tpu.memory_space<vmem>>, vector<1x128xf32>
    %105 = vector.extract_strided_slice %0 {offsets = [0, 4], sizes = [16, 1], strides = [1, 1]} : vector<16x8xf32> to vector<16x1xf32>
    %106 = vector.broadcast %104 : vector<1x128xf32> to vector<16x128xf32>
    %107 = vector.broadcast %105 : vector<16x1xf32> to vector<16x128xf32>
    %108 = arith.subf %106, %107 : vector<16x128xf32>
    %109 = vector.extract_strided_slice %1 {offsets = [0, 4], sizes = [16, 1], strides = [1, 1]} : vector<16x8xf32> to vector<16x1xf32>
    %110 = vector.broadcast %109 : vector<16x1xf32> to vector<16x128xf32>
    %111 = arith.mulf %108, %110 : vector<16x128xf32>
    %cst_30 = arith.constant 0.000000e+00 : f32
    %cst_31 = arith.constant 1.000000e+00 : f32
    %112 = vector.broadcast %cst_30 : f32 to vector<16x128xf32>
    %113 = arith.maximumf %112, %111 : vector<16x128xf32>
    %114 = vector.broadcast %cst_31 : f32 to vector<16x128xf32>
    %115 = arith.minimumf %114, %113 : vector<16x128xf32>
    %116 = vector.extract_strided_slice %2 {offsets = [0, 4], sizes = [16, 1], strides = [1, 1]} : vector<16x8xf32> to vector<16x1xf32>
    %117 = vector.broadcast %116 : vector<16x1xf32> to vector<16x128xf32>
    %118 = vector.broadcast %104 : vector<1x128xf32> to vector<16x128xf32>
    %119 = arith.subf %117, %118 : vector<16x128xf32>
    %120 = vector.extract_strided_slice %3 {offsets = [0, 4], sizes = [16, 1], strides = [1, 1]} : vector<16x8xf32> to vector<16x1xf32>
    %121 = vector.broadcast %120 : vector<16x1xf32> to vector<16x128xf32>
    %122 = arith.mulf %119, %121 : vector<16x128xf32>
    %cst_32 = arith.constant 0.000000e+00 : f32
    %cst_33 = arith.constant 1.000000e+00 : f32
    %123 = vector.broadcast %cst_32 : f32 to vector<16x128xf32>
    %124 = arith.maximumf %123, %122 : vector<16x128xf32>
    %125 = vector.broadcast %cst_33 : f32 to vector<16x128xf32>
    %126 = arith.minimumf %125, %124 : vector<16x128xf32>
    %127 = arith.minimumf %115, %126 : vector<16x128xf32>
    %128 = arith.mulf %103, %127 : vector<16x128xf32>
    %c5 = arith.constant 5 : index
    %c0_34 = arith.constant 0 : index
    %129 = vector.load %arg1[%c5, %c0_34] : memref<8x128xf32, #tpu.memory_space<vmem>>, vector<1x128xf32>
    %130 = vector.extract_strided_slice %0 {offsets = [0, 5], sizes = [16, 1], strides = [1, 1]} : vector<16x8xf32> to vector<16x1xf32>
    %131 = vector.broadcast %129 : vector<1x128xf32> to vector<16x128xf32>
    %132 = vector.broadcast %130 : vector<16x1xf32> to vector<16x128xf32>
    %133 = arith.subf %131, %132 : vector<16x128xf32>
    %134 = vector.extract_strided_slice %1 {offsets = [0, 5], sizes = [16, 1], strides = [1, 1]} : vector<16x8xf32> to vector<16x1xf32>
    %135 = vector.broadcast %134 : vector<16x1xf32> to vector<16x128xf32>
    %136 = arith.mulf %133, %135 : vector<16x128xf32>
    %cst_35 = arith.constant 0.000000e+00 : f32
    %cst_36 = arith.constant 1.000000e+00 : f32
    %137 = vector.broadcast %cst_35 : f32 to vector<16x128xf32>
    %138 = arith.maximumf %137, %136 : vector<16x128xf32>
    %139 = vector.broadcast %cst_36 : f32 to vector<16x128xf32>
    %140 = arith.minimumf %139, %138 : vector<16x128xf32>
    %141 = vector.extract_strided_slice %2 {offsets = [0, 5], sizes = [16, 1], strides = [1, 1]} : vector<16x8xf32> to vector<16x1xf32>
    %142 = vector.broadcast %141 : vector<16x1xf32> to vector<16x128xf32>
    %143 = vector.broadcast %129 : vector<1x128xf32> to vector<16x128xf32>
    %144 = arith.subf %142, %143 : vector<16x128xf32>
    %145 = vector.extract_strided_slice %3 {offsets = [0, 5], sizes = [16, 1], strides = [1, 1]} : vector<16x8xf32> to vector<16x1xf32>
    %146 = vector.broadcast %145 : vector<16x1xf32> to vector<16x128xf32>
    %147 = arith.mulf %144, %146 : vector<16x128xf32>
    %cst_37 = arith.constant 0.000000e+00 : f32
    %cst_38 = arith.constant 1.000000e+00 : f32
    %148 = vector.broadcast %cst_37 : f32 to vector<16x128xf32>
    %149 = arith.maximumf %148, %147 : vector<16x128xf32>
    %150 = vector.broadcast %cst_38 : f32 to vector<16x128xf32>
    %151 = arith.minimumf %150, %149 : vector<16x128xf32>
    %152 = arith.minimumf %140, %151 : vector<16x128xf32>
    %153 = arith.mulf %128, %152 : vector<16x128xf32>
    %c6 = arith.constant 6 : index
    %c0_39 = arith.constant 0 : index
    %154 = vector.load %arg1[%c6, %c0_39] : memref<8x128xf32, #tpu.memory_space<vmem>>, vector<1x128xf32>
    %155 = vector.extract_strided_slice %0 {offsets = [0, 6], sizes = [16, 1], strides = [1, 1]} : vector<16x8xf32> to vector<16x1xf32>
    %156 = vector.broadcast %154 : vector<1x128xf32> to vector<16x128xf32>
    %157 = vector.broadcast %155 : vector<16x1xf32> to vector<16x128xf32>
    %158 = arith.subf %156, %157 : vector<16x128xf32>
    %159 = vector.extract_strided_slice %1 {offsets = [0, 6], sizes = [16, 1], strides = [1, 1]} : vector<16x8xf32> to vector<16x1xf32>
    %160 = vector.broadcast %159 : vector<16x1xf32> to vector<16x128xf32>
    %161 = arith.mulf %158, %160 : vector<16x128xf32>
    %cst_40 = arith.constant 0.000000e+00 : f32
    %cst_41 = arith.constant 1.000000e+00 : f32
    %162 = vector.broadcast %cst_40 : f32 to vector<16x128xf32>
    %163 = arith.maximumf %162, %161 : vector<16x128xf32>
    %164 = vector.broadcast %cst_41 : f32 to vector<16x128xf32>
    %165 = arith.minimumf %164, %163 : vector<16x128xf32>
    %166 = vector.extract_strided_slice %2 {offsets = [0, 6], sizes = [16, 1], strides = [1, 1]} : vector<16x8xf32> to vector<16x1xf32>
    %167 = vector.broadcast %166 : vector<16x1xf32> to vector<16x128xf32>
    %168 = vector.broadcast %154 : vector<1x128xf32> to vector<16x128xf32>
    %169 = arith.subf %167, %168 : vector<16x128xf32>
    %170 = vector.extract_strided_slice %3 {offsets = [0, 6], sizes = [16, 1], strides = [1, 1]} : vector<16x8xf32> to vector<16x1xf32>
    %171 = vector.broadcast %170 : vector<16x1xf32> to vector<16x128xf32>
    %172 = arith.mulf %169, %171 : vector<16x128xf32>
    %cst_42 = arith.constant 0.000000e+00 : f32
    %cst_43 = arith.constant 1.000000e+00 : f32
    %173 = vector.broadcast %cst_42 : f32 to vector<16x128xf32>
    %174 = arith.maximumf %173, %172 : vector<16x128xf32>
    %175 = vector.broadcast %cst_43 : f32 to vector<16x128xf32>
    %176 = arith.minimumf %175, %174 : vector<16x128xf32>
    %177 = arith.minimumf %165, %176 : vector<16x128xf32>
    %178 = arith.mulf %153, %177 : vector<16x128xf32>
    %c7 = arith.constant 7 : index
    %c0_44 = arith.constant 0 : index
    %179 = vector.load %arg1[%c7, %c0_44] : memref<8x128xf32, #tpu.memory_space<vmem>>, vector<1x128xf32>
    %180 = vector.extract_strided_slice %0 {offsets = [0, 7], sizes = [16, 1], strides = [1, 1]} : vector<16x8xf32> to vector<16x1xf32>
    %181 = vector.broadcast %179 : vector<1x128xf32> to vector<16x128xf32>
    %182 = vector.broadcast %180 : vector<16x1xf32> to vector<16x128xf32>
    %183 = arith.subf %181, %182 : vector<16x128xf32>
    %184 = vector.extract_strided_slice %1 {offsets = [0, 7], sizes = [16, 1], strides = [1, 1]} : vector<16x8xf32> to vector<16x1xf32>
    %185 = vector.broadcast %184 : vector<16x1xf32> to vector<16x128xf32>
    %186 = arith.mulf %183, %185 : vector<16x128xf32>
    %cst_45 = arith.constant 0.000000e+00 : f32
    %cst_46 = arith.constant 1.000000e+00 : f32
    %187 = vector.broadcast %cst_45 : f32 to vector<16x128xf32>
    %188 = arith.maximumf %187, %186 : vector<16x128xf32>
    %189 = vector.broadcast %cst_46 : f32 to vector<16x128xf32>
    %190 = arith.minimumf %189, %188 : vector<16x128xf32>
    %191 = vector.extract_strided_slice %2 {offsets = [0, 7], sizes = [16, 1], strides = [1, 1]} : vector<16x8xf32> to vector<16x1xf32>
    %192 = vector.broadcast %191 : vector<16x1xf32> to vector<16x128xf32>
    %193 = vector.broadcast %179 : vector<1x128xf32> to vector<16x128xf32>
    %194 = arith.subf %192, %193 : vector<16x128xf32>
    %195 = vector.extract_strided_slice %3 {offsets = [0, 7], sizes = [16, 1], strides = [1, 1]} : vector<16x8xf32> to vector<16x1xf32>
    %196 = vector.broadcast %195 : vector<16x1xf32> to vector<16x128xf32>
    %197 = arith.mulf %194, %196 : vector<16x128xf32>
    %cst_47 = arith.constant 0.000000e+00 : f32
    %cst_48 = arith.constant 1.000000e+00 : f32
    %198 = vector.broadcast %cst_47 : f32 to vector<16x128xf32>
    %199 = arith.maximumf %198, %197 : vector<16x128xf32>
    %200 = vector.broadcast %cst_48 : f32 to vector<16x128xf32>
    %201 = arith.minimumf %200, %199 : vector<16x128xf32>
    %202 = arith.minimumf %190, %201 : vector<16x128xf32>
    %203 = arith.mulf %178, %202 : vector<16x128xf32>
    %204 = vector.broadcast %4 : vector<16x1xf32> to vector<16x128xf32>
    %205 = arith.mulf %203, %204 : vector<16x128xf32>
    %cst_49 = arith.constant dense<0.000000e+00> : vector<128xf32>
    %206 = vector.multi_reduction <add>, %205, %cst_49 [0] : vector<16x128xf32> to vector<128xf32>
    %207 = vector.shape_cast %206 : vector<128xf32> to vector<1x128xf32>
    %cst_50 = arith.constant dense<0.000000e+00> : vector<128xf32>
    %208 = vector.multi_reduction <add>, %203, %cst_50 [0] : vector<16x128xf32> to vector<128xf32>
    %209 = vector.shape_cast %208 : vector<128xf32> to vector<1x128xf32>
    %cst_51 = arith.constant 9.99999971E-10 : f32
    %210 = vector.broadcast %cst_51 : f32 to vector<1x128xf32>
    %211 = arith.addf %209, %210 : vector<1x128xf32>
    %212 = arith.divf %207, %211 : vector<1x128xf32>
    %c0_52 = arith.constant 0 : index
    %c0_53 = arith.constant 0 : index
    %213 = vector.load %arg7[%c0_52, %c0_53] : memref<1x128xf32, #tpu.memory_space<vmem>>, vector<1x128xf32>
    tpu.vector_store %arg7[%c0_52, %c0_53], %212 {strides = array<i32>} : memref<1x128xf32, #tpu.memory_space<vmem>>, vector<1x128xf32>,
    return
  }
  func.func @transform_0(%arg0: i32) -> (i32, i32) {
    %c0_i32 = arith.constant 0 : i32
    %c0_i32_0 = arith.constant 0 : i32
    return %c0_i32, %arg0 : i32, i32
  }
  func.func @transform_1(%arg0: i32) -> (i32, i32) {
    %c0_i32 = arith.constant 0 : i32
    %c0_i32_0 = arith.constant 0 : i32
    %c0_i32_1 = arith.constant 0 : i32
    return %c0_i32, %c0_i32_0 : i32, i32
  }
  func.func @transform_2(%arg0: i32) -> (i32, i32) {
    %c0_i32 = arith.constant 0 : i32
    %c0_i32_0 = arith.constant 0 : i32
    %c0_i32_1 = arith.constant 0 : i32
    return %c0_i32, %c0_i32_0 : i32, i32
  }
  func.func @transform_3(%arg0: i32) -> (i32, i32) {
    %c0_i32 = arith.constant 0 : i32
    %c0_i32_0 = arith.constant 0 : i32
    %c0_i32_1 = arith.constant 0 : i32
    return %c0_i32, %c0_i32_0 : i32, i32
  }
  func.func @transform_4(%arg0: i32) -> (i32, i32) {
    %c0_i32 = arith.constant 0 : i32
    %c0_i32_0 = arith.constant 0 : i32
    %c0_i32_1 = arith.constant 0 : i32
    return %c0_i32, %c0_i32_0 : i32, i32
  }
  func.func @transform_5(%arg0: i32) -> (i32, i32) {
    %c0_i32 = arith.constant 0 : i32
    %c0_i32_0 = arith.constant 0 : i32
    %c0_i32_1 = arith.constant 0 : i32
    return %c0_i32, %c0_i32_0 : i32, i32
  }
  func.func @transform_6(%arg0: i32) -> (i32, i32) {
    %c0_i32 = arith.constant 0 : i32
    %c0_i32_0 = arith.constant 0 : i32
    return %c0_i32, %arg0 : i32, i32
  }
}

</mosaic_0001>

<llo_original>
// kernel: tpu_custom_call.1
$region0: #{tpu_custom_call.1}
  #allocation0 [shape = 'u32[]', space=smem, size = 0x4, offset = 0x4, fixed_abs, tag = 'smem constant byte address 0x4 - core index']
  #allocation1 [shape = 'u32[144,128]{1,0:T(1,128)}', space=vmem, size = 0x12000, scoped, tag = 'internal scratch']
  %s0 = inlined_call_operand.vmem [shape: f32[8,128], index: 0, kind: input, shape index: {}]
  %s1 = inlined_call_operand.vmem [shape: f32[16,8], index: 1, kind: input, shape index: {}]
  %s2 = inlined_call_operand.vmem [shape: f32[16,8], index: 2, kind: input, shape index: {}]
  %s3 = inlined_call_operand.vmem [shape: f32[16,8], index: 3, kind: input, shape index: {}]
  %s4 = inlined_call_operand.vmem [shape: f32[16,8], index: 4, kind: input, shape index: {}]
  %s5 = inlined_call_operand.vmem [shape: f32[16,1], index: 5, kind: input, shape index: {}]
  %s6 = inlined_call_operand.hbm [shape: f32[1,128], index: 6, kind: output, shape index: {}]
  %s7 = sld [smem:[#allocation0]]
  $region34: #{tpu_custom_call.1} parent=0
    _
  %s9 = ssub.s32 1, %s7
  %s10 = scalar_select 0, %s9, %s7
  $region1: #{tpu_custom_call.1} parent=0
    #allocation2 [shape = 'u8[512]{0}', space=vmem, size = 0x400, scoped, tag = 'output window, operand 0, single buffered']
    #allocation3 [shape = 's32[1]{0}', space=sflag, size = 0x4, scoped, tag = 'scoped memory for tpu_custom_call.1']
    %11 = vsyncpa [#allocation3], 0
    // Predicated region
    $region2: #{tpu_custom_call.1} parent=1 // pred_check
      _
    $region3: #{tpu_custom_call.1} parent=1 // pred_check_branch
      %13 = sbr.rel (0) target = $region5
    $region4: #{tpu_custom_call.1} parent=1 // pred_region
      _
    $region5: #{tpu_custom_call.1} parent=1 // pred_fallthru
      _
    // Predicated region
    $region6: #{tpu_custom_call.1} parent=1 // pred_check
      _
    $region7: #{tpu_custom_call.1} parent=1 // pred_check_branch
      %15 = sbr.rel (0) target = $region9
    $region8: #{tpu_custom_call.1} parent=1 // pred_region
      _
    $region9: #{tpu_custom_call.1} parent=1 // pred_fallthru
      _
    // Predicated region
    $region10: #{tpu_custom_call.1} parent=1 // pred_check
      _
    $region11: #{tpu_custom_call.1} parent=1 // pred_check_branch
      %17 = sbr.rel (0) target = $region13
    $region12: #{tpu_custom_call.1} parent=1 // pred_region
      _
    $region13: #{tpu_custom_call.1} parent=1 // pred_fallthru
      _
    // Predicated region
    $region14: #{tpu_custom_call.1} parent=1 // pred_check
      _
    $region15: #{tpu_custom_call.1} parent=1 // pred_check_branch
      %19 = sbr.rel (0) target = $region17
    $region16: #{tpu_custom_call.1} parent=1 // pred_region
      _
    $region17: #{tpu_custom_call.1} parent=1 // pred_fallthru
      _
    // Predicated region
    $region18: #{tpu_custom_call.1} parent=1 // pred_check
      _
    $region19: #{tpu_custom_call.1} parent=1 // pred_check_branch
      %21 = sbr.rel (0) target = $region21
    $region20: #{tpu_custom_call.1} parent=1 // pred_region
      _
    $region21: #{tpu_custom_call.1} parent=1 // pred_fallthru
      _
    // Predicated region
    $region22: #{tpu_custom_call.1} parent=1 // pred_check
      _
    $region23: #{tpu_custom_call.1} parent=1 // pred_check_branch
      %23 = sbr.rel (0) target = $region25
    $region24: #{tpu_custom_call.1} parent=1 // pred_region
      _
    $region25: #{tpu_custom_call.1} parent=1 // pred_fallthru
      _
    %v24 = vld [vmem:[%s1] sm:$0xff]
    %v25 = vld [vmem:[%s1 + $0x8] sm:$0xff]
    %v26 = vld [vmem:[%s2] sm:$0xff]
    %v27 = vld [vmem:[%s2 + $0x8] sm:$0xff]
    %v28 = vld [vmem:[%s3] sm:$0xff]
    %v29 = vld [vmem:[%s3 + $0x8] sm:$0xff]
    %v30 = vld [vmem:[%s4] sm:$0xff]
    %v31 = vld [vmem:[%s4 + $0x8] sm:$0xff]
    %v32 = vld [vmem:[%s5] sm:$0xff]
    %v33 = vld [vmem:[%s5 + $0x8] sm:$0xff]
    %v34 = vld [vmem:[%s0] sm:$0x1]
    %v35 = vlaneseq
    %v36 = vshrl.u32 %v35, 7
    %v37 = vsub.s32 0, %v36
    %v38 = vrot.slane %v34, %v37
    %40 = vset.pattern.permute.xlu0 0
    %41 = vperm.xlu0 %40, %v24
    %v42 = vpop.permute.xlu0 %41
    %45 = vset.pattern.permute.xlu0 0
    %46 = vperm.xlu0 %45, %v25
    %v47 = vpop.permute.xlu0 %46
    %v49 = vsub.f32 %v38, %v42
    %v50 = vsub.f32 %v38, %v47
    %52 = vset.pattern.permute.xlu0 0
    %53 = vperm.xlu0 %52, %v26
    %v54 = vpop.permute.xlu0 %53
    %57 = vset.pattern.permute.xlu0 0
    %58 = vperm.xlu0 %57, %v27
    %v59 = vpop.permute.xlu0 %58
    %v61 = vmul.f32 %v49, %v54
    %v62 = vmul.f32 %v50, %v59
    %v63 = vmax.f32 %v61, 0.0
    %v64 = vmax.f32 %v62, 0.0
    %v65 = vmin.f32 %v63, 1.0
    %v66 = vmin.f32 %v64, 1.0
    %68 = vset.pattern.permute.xlu0 0
    %69 = vperm.xlu0 %68, %v28
    %v70 = vpop.permute.xlu0 %69
    %73 = vset.pattern.permute.xlu0 0
    %74 = vperm.xlu0 %73, %v29
    %v75 = vpop.permute.xlu0 %74
    %v77 = vsub.f32 %v70, %v38
    %v78 = vsub.f32 %v75, %v38
    %80 = vset.pattern.permute.xlu0 0
    %81 = vperm.xlu0 %80, %v30
    %v82 = vpop.permute.xlu0 %81
    %85 = vset.pattern.permute.xlu0 0
    %86 = vperm.xlu0 %85, %v31
    %v87 = vpop.permute.xlu0 %86
    %v89 = vmul.f32 %v77, %v82
    %v90 = vmul.f32 %v78, %v87
    %v91 = vmax.f32 %v89, 0.0
    %v92 = vmax.f32 %v90, 0.0
    %v93 = vmin.f32 %v91, 1.0
    %v94 = vmin.f32 %v92, 1.0
    %v95 = vmin.f32 %v65, %v93
    %v96 = vmin.f32 %v66, %v94
    %v97 = vld [vmem:[%s0 + $0x1] sm:$0x1]
    %v98 = vlaneseq
    %v99 = vshrl.u32 %v98, 7
    %v100 = vsub.s32 0, %v99
    %v101 = vrot.slane %v97, %v100
    %102 = vset.pattern.permute.xlu0 1
    %103 = vperm.xlu0 %102, %v24
    %v104 = vpop.permute.xlu0 %103
    %106 = vset.pattern.permute.xlu0 1
    %107 = vperm.xlu0 %106, %v25
    %v108 = vpop.permute.xlu0 %107
    %v110 = vsub.f32 %v101, %v104
    %v111 = vsub.f32 %v101, %v108
    %112 = vset.pattern.permute.xlu0 1
    %113 = vperm.xlu0 %112, %v26
    %v114 = vpop.permute.xlu0 %113
    %116 = vset.pattern.permute.xlu0 1
    %117 = vperm.xlu0 %116, %v27
    %v118 = vpop.permute.xlu0 %117
    %v120 = vmul.f32 %v110, %v114
    %v121 = vmul.f32 %v111, %v118
    %v122 = vmax.f32 %v120, 0.0
    %v123 = vmax.f32 %v121, 0.0
    %v124 = vmin.f32 %v122, 1.0
    %v125 = vmin.f32 %v123, 1.0
    %126 = vset.pattern.permute.xlu0 1
    %127 = vperm.xlu0 %126, %v28
    %v128 = vpop.permute.xlu0 %127
    %130 = vset.pattern.permute.xlu0 1
    %131 = vperm.xlu0 %130, %v29
    %v132 = vpop.permute.xlu0 %131
    %v134 = vsub.f32 %v128, %v101
    %v135 = vsub.f32 %v132, %v101
    %136 = vset.pattern.permute.xlu0 1
    %137 = vperm.xlu0 %136, %v30
    %v138 = vpop.permute.xlu0 %137
    %140 = vset.pattern.permute.xlu0 1
    %141 = vperm.xlu0 %140, %v31
    %v142 = vpop.permute.xlu0 %141
    %v144 = vmul.f32 %v134, %v138
    %v145 = vmul.f32 %v135, %v142
    %v146 = vmax.f32 %v144, 0.0
    %v147 = vmax.f32 %v145, 0.0
    %v148 = vmin.f32 %v146, 1.0
    %v149 = vmin.f32 %v147, 1.0
    %v150 = vmin.f32 %v124, %v148
    %v151 = vmin.f32 %v125, %v149
    %v152 = vmul.f32 %v95, %v150
    %v153 = vmul.f32 %v96, %v151
    %v154 = vld [vmem:[%s0 + $0x2] sm:$0x1]
    %v155 = vlaneseq
    %v156 = vshrl.u32 %v155, 7
    %v157 = vsub.s32 0, %v156
    %v158 = vrot.slane %v154, %v157
    %159 = vset.pattern.permute.xlu0 2
    %160 = vperm.xlu0 %159, %v24
    %v161 = vpop.permute.xlu0 %160
    %163 = vset.pattern.permute.xlu0 2
    %164 = vperm.xlu0 %163, %v25
    %v165 = vpop.permute.xlu0 %164
    %v167 = vsub.f32 %v158, %v161
    %v168 = vsub.f32 %v158, %v165
    %169 = vset.pattern.permute.xlu0 2
    %170 = vperm.xlu0 %169, %v26
    %v171 = vpop.permute.xlu0 %170
    %173 = vset.pattern.permute.xlu0 2
    %174 = vperm.xlu0 %173, %v27
    %v175 = vpop.permute.xlu0 %174
    %v177 = vmul.f32 %v167, %v171
    %v178 = vmul.f32 %v168, %v175
    %v179 = vmax.f32 %v177, 0.0
    %v180 = vmax.f32 %v178, 0.0
    %v181 = vmin.f32 %v179, 1.0
    %v182 = vmin.f32 %v180, 1.0
    %183 = vset.pattern.permute.xlu0 2
    %184 = vperm.xlu0 %183, %v28
    %v185 = vpop.permute.xlu0 %184
    %187 = vset.pattern.permute.xlu0 2
    %188 = vperm.xlu0 %187, %v29
    %v189 = vpop.permute.xlu0 %188
    %v191 = vsub.f32 %v185, %v158
    %v192 = vsub.f32 %v189, %v158
    %193 = vset.pattern.permute.xlu0 2
    %194 = vperm.xlu0 %193, %v30
    %v195 = vpop.permute.xlu0 %194
    %197 = vset.pattern.permute.xlu0 2
    %198 = vperm.xlu0 %197, %v31
    %v199 = vpop.permute.xlu0 %198
    %v201 = vmul.f32 %v191, %v195
    %v202 = vmul.f32 %v192, %v199
    %v203 = vmax.f32 %v201, 0.0
    %v204 = vmax.f32 %v202, 0.0
    %v205 = vmin.f32 %v203, 1.0
    %v206 = vmin.f32 %v204, 1.0
    %v207 = vmin.f32 %v181, %v205
    %v208 = vmin.f32 %v182, %v206
    %v209 = vmul.f32 %v152, %v207
    %v210 = vmul.f32 %v153, %v208
    %v211 = vld [vmem:[%s0 + $0x3] sm:$0x1]
    %v212 = vlaneseq
    %v213 = vshrl.u32 %v212, 7
    %v214 = vsub.s32 0, %v213
    %v215 = vrot.slane %v211, %v214
    %216 = vset.pattern.permute.xlu0 3
    %217 = vperm.xlu0 %216, %v24
    %v218 = vpop.permute.xlu0 %217
    %220 = vset.pattern.permute.xlu0 3
    %221 = vperm.xlu0 %220, %v25
    %v222 = vpop.permute.xlu0 %221
    %v224 = vsub.f32 %v215, %v218
    %v225 = vsub.f32 %v215, %v222
    %226 = vset.pattern.permute.xlu0 3
    %227 = vperm.xlu0 %226, %v26
    %v228 = vpop.permute.xlu0 %227
    %230 = vset.pattern.permute.xlu0 3
    %231 = vperm.xlu0 %230, %v27
    %v232 = vpop.permute.xlu0 %231
    %v234 = vmul.f32 %v224, %v228
    %v235 = vmul.f32 %v225, %v232
    %v236 = vmax.f32 %v234, 0.0
    %v237 = vmax.f32 %v235, 0.0
    %v238 = vmin.f32 %v236, 1.0
    %v239 = vmin.f32 %v237, 1.0
    %240 = vset.pattern.permute.xlu0 3
    %241 = vperm.xlu0 %240, %v28
    %v242 = vpop.permute.xlu0 %241
    %244 = vset.pattern.permute.xlu0 3
    %245 = vperm.xlu0 %244, %v29
    %v246 = vpop.permute.xlu0 %245
    %v248 = vsub.f32 %v242, %v215
    %v249 = vsub.f32 %v246, %v215
    %250 = vset.pattern.permute.xlu0 3
    %251 = vperm.xlu0 %250, %v30
    %v252 = vpop.permute.xlu0 %251
    %254 = vset.pattern.permute.xlu0 3
    %255 = vperm.xlu0 %254, %v31
    %v256 = vpop.permute.xlu0 %255
    %v258 = vmul.f32 %v248, %v252
    %v259 = vmul.f32 %v249, %v256
    %v260 = vmax.f32 %v258, 0.0
    %v261 = vmax.f32 %v259, 0.0
    %v262 = vmin.f32 %v260, 1.0
    %v263 = vmin.f32 %v261, 1.0
    %v264 = vmin.f32 %v238, %v262
    %v265 = vmin.f32 %v239, %v263
    %v266 = vmul.f32 %v209, %v264
    %v267 = vmul.f32 %v210, %v265
    %v268 = vld [vmem:[%s0 + $0x4] sm:$0x1]
    %v269 = vlaneseq
    %v270 = vshrl.u32 %v269, 7
    %v271 = vsub.s32 0, %v270
    %v272 = vrot.slane %v268, %v271
    %273 = vset.pattern.permute.xlu0 4
    %274 = vperm.xlu0 %273, %v24
    %v275 = vpop.permute.xlu0 %274
    %277 = vset.pattern.permute.xlu0 4
    %278 = vperm.xlu0 %277, %v25
    %v279 = vpop.permute.xlu0 %278
    %v281 = vsub.f32 %v272, %v275
    %v282 = vsub.f32 %v272, %v279
    %283 = vset.pattern.permute.xlu0 4
    %284 = vperm.xlu0 %283, %v26
    %v285 = vpop.permute.xlu0 %284
    %287 = vset.pattern.permute.xlu0 4
    %288 = vperm.xlu0 %287, %v27
    %v289 = vpop.permute.xlu0 %288
    %v291 = vmul.f32 %v281, %v285
    %v292 = vmul.f32 %v282, %v289
    %v293 = vmax.f32 %v291, 0.0
    %v294 = vmax.f32 %v292, 0.0
    %v295 = vmin.f32 %v293, 1.0
    %v296 = vmin.f32 %v294, 1.0
    %297 = vset.pattern.permute.xlu0 4
    %298 = vperm.xlu0 %297, %v28
    %v299 = vpop.permute.xlu0 %298
    %301 = vset.pattern.permute.xlu0 4
    %302 = vperm.xlu0 %301, %v29
    %v303 = vpop.permute.xlu0 %302
    %v305 = vsub.f32 %v299, %v272
    %v306 = vsub.f32 %v303, %v272
    %307 = vset.pattern.permute.xlu0 4
    %308 = vperm.xlu0 %307, %v30
    %v309 = vpop.permute.xlu0 %308
    %311 = vset.pattern.permute.xlu0 4
    %312 = vperm.xlu0 %311, %v31
    %v313 = vpop.permute.xlu0 %312
    %v315 = vmul.f32 %v305, %v309
    %v316 = vmul.f32 %v306, %v313
    %v317 = vmax.f32 %v315, 0.0
    %v318 = vmax.f32 %v316, 0.0
    %v319 = vmin.f32 %v317, 1.0
    %v320 = vmin.f32 %v318, 1.0
    %v321 = vmin.f32 %v295, %v319
    %v322 = vmin.f32 %v296, %v320
    %v323 = vmul.f32 %v266, %v321
    %v324 = vmul.f32 %v267, %v322
    %v325 = vld [vmem:[%s0 + $0x5] sm:$0x1]
    %v326 = vlaneseq
    %v327 = vshrl.u32 %v326, 7
    %v328 = vsub.s32 0, %v327
    %v329 = vrot.slane %v325, %v328
    %330 = vset.pattern.permute.xlu0 5
    %331 = vperm.xlu0 %330, %v24
    %v332 = vpop.permute.xlu0 %331
    %334 = vset.pattern.permute.xlu0 5
    %335 = vperm.xlu0 %334, %v25
    %v336 = vpop.permute.xlu0 %335
    %v338 = vsub.f32 %v329, %v332
    %v339 = vsub.f32 %v329, %v336
    %340 = vset.pattern.permute.xlu0 5
    %341 = vperm.xlu0 %340, %v26
    %v342 = vpop.permute.xlu0 %341
    %344 = vset.pattern.permute.xlu0 5
    %345 = vperm.xlu0 %344, %v27
    %v346 = vpop.permute.xlu0 %345
    %v348 = vmul.f32 %v338, %v342
    %v349 = vmul.f32 %v339, %v346
    %v350 = vmax.f32 %v348, 0.0
    %v351 = vmax.f32 %v349, 0.0
    %v352 = vmin.f32 %v350, 1.0
    %v353 = vmin.f32 %v351, 1.0
    %354 = vset.pattern.permute.xlu0 5
    %355 = vperm.xlu0 %354, %v28
    %v356 = vpop.permute.xlu0 %355
    %358 = vset.pattern.permute.xlu0 5
    %359 = vperm.xlu0 %358, %v29
    %v360 = vpop.permute.xlu0 %359
    %v362 = vsub.f32 %v356, %v329
    %v363 = vsub.f32 %v360, %v329
    %364 = vset.pattern.permute.xlu0 5
    %365 = vperm.xlu0 %364, %v30
    %v366 = vpop.permute.xlu0 %365
    %368 = vset.pattern.permute.xlu0 5
    %369 = vperm.xlu0 %368, %v31
    %v370 = vpop.permute.xlu0 %369
    %v372 = vmul.f32 %v362, %v366
    %v373 = vmul.f32 %v363, %v370
    %v374 = vmax.f32 %v372, 0.0
    %v375 = vmax.f32 %v373, 0.0
    %v376 = vmin.f32 %v374, 1.0
    %v377 = vmin.f32 %v375, 1.0
    %v378 = vmin.f32 %v352, %v376
    %v379 = vmin.f32 %v353, %v377
    %v380 = vmul.f32 %v323, %v378
    %v381 = vmul.f32 %v324, %v379
    %v382 = vld [vmem:[%s0 + $0x6] sm:$0x1]
    %v383 = vlaneseq
    %v384 = vshrl.u32 %v383, 7
    %v385 = vsub.s32 0, %v384
    %v386 = vrot.slane %v382, %v385
    %387 = vset.pattern.permute.xlu0 6
    %388 = vperm.xlu0 %387, %v24
    %v389 = vpop.permute.xlu0 %388
    %391 = vset.pattern.permute.xlu0 6
    %392 = vperm.xlu0 %391, %v25
    %v393 = vpop.permute.xlu0 %392
    %v395 = vsub.f32 %v386, %v389
    %v396 = vsub.f32 %v386, %v393
    %397 = vset.pattern.permute.xlu0 6
    %398 = vperm.xlu0 %397, %v26
    %v399 = vpop.permute.xlu0 %398
    %401 = vset.pattern.permute.xlu0 6
    %402 = vperm.xlu0 %401, %v27
    %v403 = vpop.permute.xlu0 %402
    %v405 = vmul.f32 %v395, %v399
    %v406 = vmul.f32 %v396, %v403
    %v407 = vmax.f32 %v405, 0.0
    %v408 = vmax.f32 %v406, 0.0
    %v409 = vmin.f32 %v407, 1.0
    %v410 = vmin.f32 %v408, 1.0
    %411 = vset.pattern.permute.xlu0 6
    %412 = vperm.xlu0 %411, %v28
    %v413 = vpop.permute.xlu0 %412
    %415 = vset.pattern.permute.xlu0 6
    %416 = vperm.xlu0 %415, %v29
    %v417 = vpop.permute.xlu0 %416
    %v419 = vsub.f32 %v413, %v386
    %v420 = vsub.f32 %v417, %v386
    %421 = vset.pattern.permute.xlu0 6
    %422 = vperm.xlu0 %421, %v30
    %v423 = vpop.permute.xlu0 %422
    %425 = vset.pattern.permute.xlu0 6
    %426 = vperm.xlu0 %425, %v31
    %v427 = vpop.permute.xlu0 %426
    %v429 = vmul.f32 %v419, %v423
    %v430 = vmul.f32 %v420, %v427
    %v431 = vmax.f32 %v429, 0.0
    %v432 = vmax.f32 %v430, 0.0
    %v433 = vmin.f32 %v431, 1.0
    %v434 = vmin.f32 %v432, 1.0
    %v435 = vmin.f32 %v409, %v433
    %v436 = vmin.f32 %v410, %v434
    %v437 = vmul.f32 %v380, %v435
    %v438 = vmul.f32 %v381, %v436
    %v439 = vld [vmem:[%s0 + $0x7] sm:$0x1]
    %v440 = vlaneseq
    %v441 = vshrl.u32 %v440, 7
    %v442 = vsub.s32 0, %v441
    %v443 = vrot.slane %v439, %v442
    %444 = vset.pattern.permute.xlu0 7
    %445 = vperm.xlu0 %444, %v24
    %v446 = vpop.permute.xlu0 %445
    %448 = vset.pattern.permute.xlu0 7
    %449 = vperm.xlu0 %448, %v25
    %v450 = vpop.permute.xlu0 %449
    %v452 = vsub.f32 %v443, %v446
    %v453 = vsub.f32 %v443, %v450
    %454 = vset.pattern.permute.xlu0 7
    %455 = vperm.xlu0 %454, %v26
    %v456 = vpop.permute.xlu0 %455
    %458 = vset.pattern.permute.xlu0 7
    %459 = vperm.xlu0 %458, %v27
    %v460 = vpop.permute.xlu0 %459
    %v462 = vmul.f32 %v452, %v456
    %v463 = vmul.f32 %v453, %v460
    %v464 = vmax.f32 %v462, 0.0
    %v465 = vmax.f32 %v463, 0.0
    %v466 = vmin.f32 %v464, 1.0
    %v467 = vmin.f32 %v465, 1.0
    %468 = vset.pattern.permute.xlu0 7
    %469 = vperm.xlu0 %468, %v28
    %v470 = vpop.permute.xlu0 %469
    %472 = vset.pattern.permute.xlu0 7
    %473 = vperm.xlu0 %472, %v29
    %v474 = vpop.permute.xlu0 %473
    %v476 = vsub.f32 %v470, %v443
    %v477 = vsub.f32 %v474, %v443
    %478 = vset.pattern.permute.xlu0 7
    %479 = vperm.xlu0 %478, %v30
    %v480 = vpop.permute.xlu0 %479
    %482 = vset.pattern.permute.xlu0 7
    %483 = vperm.xlu0 %482, %v31
    %v484 = vpop.permute.xlu0 %483
    %v486 = vmul.f32 %v476, %v480
    %v487 = vmul.f32 %v477, %v484
    %v488 = vmax.f32 %v486, 0.0
    %v489 = vmax.f32 %v487, 0.0
    %v490 = vmin.f32 %v488, 1.0
    %v491 = vmin.f32 %v489, 1.0
    %v492 = vmin.f32 %v466, %v490
    %v493 = vmin.f32 %v467, %v491
    %v494 = vmul.f32 %v437, %v492
    %v495 = vmul.f32 %v438, %v493
    %497 = vset.pattern.permute.xlu0 0
    %498 = vperm.xlu0 %497, %v32
    %v499 = vpop.permute.xlu0 %498
    %502 = vset.pattern.permute.xlu0 0
    %503 = vperm.xlu0 %502, %v33
    %v504 = vpop.permute.xlu0 %503
    %v506 = vmul.f32 %v494, %v499
    %v507 = vmul.f32 %v495, %v504
    %v508 = vadd.f32 %v506, %v507
    %v509 = vrot.slane %v508, 4
    %v510 = vadd.f32 %v508, %v509
    %v511 = vrot.slane %v510, 2
    %v512 = vadd.f32 %v510, %v511
    %v513 = vrot.slane %v512, 1
    %v514 = vadd.f32 %v512, %v513
    %v515 = vadd.f32 %v494, %v495
    %v516 = vrot.slane %v515, 4
    %v517 = vadd.f32 %v515, %v516
    %v518 = vrot.slane %v517, 2
    %v519 = vadd.f32 %v517, %v518
    %v520 = vrot.slane %v519, 1
    %v521 = vadd.f32 %v519, %v520
    %v522 = vadd.f32 %v521, 1e-09
    %v523 = vrcp.pop %v522
    %v524 = vmul.f32 %v514, %v523
    %525 = vst [vmem:[#allocation2] sm:$0x1] %v524
    // Predicated region
    $region26: #{tpu_custom_call.1} parent=1 // pred_check
      _
    $region27: #{tpu_custom_call.1} parent=1 // pred_check_branch
      %527 = sbr.rel (0) target = $region29
    $region28: #{tpu_custom_call.1} parent=1 // pred_region
      %s529 = ssub.s32 16, 16
      %530 = vsyncadd [#allocation3], %s529
      %s532 = sshll.u32 [#allocation2], 4
      %s533 = int_to_ptr.vmem [resolvable:$true] %s532
      %535 = dma.vmem_to_hbm [thread:$0]  %s533, 16, %s6, [#allocation3]
    $region29: #{tpu_custom_call.1} parent=1 // pred_fallthru
      _
    // Predicated region
    $region30: #{tpu_custom_call.1} parent=1 // pred_check
      _
    $region31: #{tpu_custom_call.1} parent=1 // pred_check_branch
      %537 = sbr.rel (0) target = $region33
    $region32: #{tpu_custom_call.1} parent=1 // pred_region
      %538 = dma.done [#allocation3], 16
    $region33: #{tpu_custom_call.1} parent=1 // pred_fallthru
      _
    %539 = vsyncpa [#allocation3], 1

</llo_original>
